<compile_context>
chip_gen: v5e
topology: v5e:2x2
jax: 0.10.0
libtpu: 0.0.40
codegen_flags: <defaults>
</compile_context>

<pallas_src>
import functools
import math

import jax
import jax.numpy as jnp
from jax.experimental import pallas as pl


# ----------------------------------------------------------------------------
# Fused kernel: entire GCN2 forward in one VMEM-resident block.
# Shapes are tiny, so every operand is a single full block (no grid).
# ----------------------------------------------------------------------------
def _gcn2_fused_kernel(x_ref, adj_ref, w1_ref, b1_ref, w2_ref, b2_ref, out_ref,
                       *, nclass):
    # Layer 1: h1 = relu(adj @ (x @ W1) + b1)                       [N, NHID]
    s1 = jnp.dot(x_ref[...], w1_ref[...], preferred_element_type=jnp.float32)
    h1 = jnp.maximum(
        jnp.dot(adj_ref[...], s1, preferred_element_type=jnp.float32) + b1_ref[...],
        0.0)

    # Layer 2 (class dim lane-padded to Cp): h2 = relu(adj @ (h1 @ W2p) + b2p)  [N, Cp]
    s2 = jnp.dot(h1, w2_ref[...], preferred_element_type=jnp.float32)
    h2 = jnp.maximum(
        jnp.dot(adj_ref[...], s2, preferred_element_type=jnp.float32) + b2_ref[...],
        0.0)

    # Global mean pool over nodes via MXU ones-vector matmul (keeps XLU slot free).
    n = h2.shape[0]
    ones = jnp.ones((1, n), jnp.float32)
    pooled = jnp.dot(ones, h2, preferred_element_type=jnp.float32) * (1.0 / n)  # [1, Cp]
    pooled = jnp.maximum(pooled, 0.0)   # relu (h2 >= 0 already, kept to match spec)
    # TODO(synk): F.dropout is identity at inference time; not lowered.

    # log_softmax over the first `nclass` lanes only (remaining lanes are zero padding).
    lane = jax.lax.broadcasted_iota(jnp.int32, pooled.shape, 1)      # [1, Cp]
    valid = lane < nclass
    m = jnp.max(jnp.where(valid, pooled, -jnp.inf), axis=1, keepdims=True)
    e = jnp.where(valid, jnp.exp(pooled - m), 0.0)
    lse = jnp.log(jnp.sum(e, axis=1, keepdims=True))
    # Full-width (lane-dense) unmasked store; lanes >= nclass hold don't-care values
    # that the host-side wrapper slices off.
    out_ref[...] = pooled - m - lse


# ----------------------------------------------------------------------------
# GCN2 forward (single Pallas launch)
# ----------------------------------------------------------------------------
def gcn2_forward(params, x, adj):
    n, nfeat = x.shape
    nhid = params["w1"].shape[1]
    nclass = params["w2"].shape[1]
    cpad = pl.cdiv(nclass, 128) * 128          # lane-dense class dim (>= 128)

    # Zero-pad layer-2 weight/bias along the class (lane) dim: padded columns produce
    # zero activations and are excluded from the softmax by the in-kernel mask.
    w2p = jnp.pad(params["w2"], ((0, 0), (0, cpad - nclass)))
    b2p = jnp.pad(params["b2"], ((0, 0), (0, cpad - nclass)))

    kernel = functools.partial(_gcn2_fused_kernel, nclass=nclass)
    padded = pl.pallas_call(
        kernel,
        out_shape=jax.ShapeDtypeStruct((1, cpad), jnp.float32),
        in_specs=[
            pl.BlockSpec((n, nfeat), lambda: (0, 0)),     # x
            pl.BlockSpec((n, n), lambda: (0, 0)),         # adj
            pl.BlockSpec((nfeat, nhid), lambda: (0, 0)),  # W1
            pl.BlockSpec((1, nhid), lambda: (0, 0)),      # b1
            pl.BlockSpec((nhid, cpad), lambda: (0, 0)),   # W2 (padded)
            pl.BlockSpec((1, cpad), lambda: (0, 0)),      # b2 (padded)
        ],
        out_specs=pl.BlockSpec((1, cpad), lambda: (0, 0)),
    )(x, adj, params["w1"], params["b1"], w2p, b2p)
    return padded[:, :nclass]


def init_params(key, nfeat, nhid, nclass):
    """Deterministic init mirroring GraphConvolution.reset_parameters:
    uniform(-1/sqrt(out_features), 1/sqrt(out_features)) for weight and bias."""
    k1, k2, k3, k4 = jax.random.split(key, 4)
    s1 = 1.0 / math.sqrt(nhid)
    s2 = 1.0 / math.sqrt(nclass)
    return {
        "w1": jax.random.uniform(k1, (nfeat, nhid), jnp.float32, -s1, s1),
        "b1": jax.random.uniform(k2, (1, nhid), jnp.float32, -s1, s1),
        "w2": jax.random.uniform(k3, (nhid, nclass), jnp.float32, -s2, s2),
        "b2": jax.random.uniform(k4, (1, nclass), jnp.float32, -s2, s2),
    }


if __name__ == "__main__":
    key = jax.random.PRNGKey(0)
    N, NFEAT, NHID, NCLASS = 16, 32, 32, 8

    kx, ka, kp = jax.random.split(key, 3)
    x = jax.random.normal(kx, (N, NFEAT), jnp.float32)

    # Symmetric row-normalized adjacency with self-loops (typical GCN input).
    a = (jax.random.uniform(ka, (N, N)) < 0.3).astype(jnp.float32)
    a = jnp.maximum(a, a.T) + jnp.eye(N, dtype=jnp.float32)
    adj = a / jnp.sum(a, axis=1, keepdims=True)

    params = init_params(kp, NFEAT, NHID, NCLASS)

    out = gcn2_forward(params, x, adj)
    jax.block_until_ready(out)

    # Sanity: reference in plain JAX.
    h1 = jnp.maximum(adj @ (x @ params["w1"]) + params["b1"], 0.0)
    h2 = jnp.maximum(adj @ (h1 @ params["w2"]) + params["b2"], 0.0)
    p = jnp.maximum(jnp.mean(h2, axis=0, keepdims=True), 0.0)
    ref = jax.nn.log_softmax(p, axis=1)
    assert out.shape == (1, NCLASS)
    assert jnp.allclose(out, ref, atol=1e-5, rtol=1e-5)

    print("KERNEL_OK")
</pallas_src>

<mosaic_0001>
module attributes {stable_mosaic.version = 11 : i64} {
  func.func @_gcn2_fused_kernel(%arg0: memref<16x32xf32, #tpu.memory_space<vmem>>, %arg1: memref<16x16xf32, #tpu.memory_space<vmem>>, %arg2: memref<32x32xf32, #tpu.memory_space<vmem>>, %arg3: memref<1x32xf32, #tpu.memory_space<vmem>>, %arg4: memref<32x128xf32, #tpu.memory_space<vmem>>, %arg5: memref<1x128xf32, #tpu.memory_space<vmem>>, %arg6: memref<1x128xf32, #tpu.memory_space<vmem>>) attributes {dimension_semantics = [], scalar_prefetch = 0 : i64, scratch_operands = 0 : i64, tpu.core_type = #tpu.core_type<tc>} {
    %c0 = arith.constant 0 : index
    %c0_0 = arith.constant 0 : index
    %0 = vector.load %arg0[%c0, %c0_0] : memref<16x32xf32, #tpu.memory_space<vmem>>, vector<16x32xf32>
    %c0_1 = arith.constant 0 : index
    %c0_2 = arith.constant 0 : index
    %1 = vector.load %arg2[%c0_1, %c0_2] : memref<32x32xf32, #tpu.memory_space<vmem>>, vector<32x32xf32>
    %cst = arith.constant dense<0.000000e+00> : vector<16x32xf32>
    %2 = tpu.matmul %0, %1, %cst {dimension_numbers = #tpu.dot_dimension_numbers<[1], [0], [0], [1], [0, 0, 1, 1], [], []>} : vector<16x32xf32>, vector<32x32xf32>, vector<16x32xf32> -> vector<16x32xf32>
    %c0_3 = arith.constant 0 : index
    %c0_4 = arith.constant 0 : index
    %3 = vector.load %arg1[%c0_3, %c0_4] : memref<16x16xf32, #tpu.memory_space<vmem>>, vector<16x16xf32>
    %cst_5 = arith.constant dense<0.000000e+00> : vector<16x32xf32>
    %4 = tpu.matmul %3, %2, %cst_5 {dimension_numbers = #tpu.dot_dimension_numbers<[1], [0], [0], [1], [0, 0, 1, 1], [], []>} : vector<16x16xf32>, vector<16x32xf32>, vector<16x32xf32> -> vector<16x32xf32>
    %c0_6 = arith.constant 0 : index
    %c0_7 = arith.constant 0 : index
    %5 = vector.load %arg3[%c0_6, %c0_7] : memref<1x32xf32, #tpu.memory_space<vmem>>, vector<1x32xf32>
    %6 = vector.broadcast %5 : vector<1x32xf32> to vector<16x32xf32>
    %7 = arith.addf %4, %6 : vector<16x32xf32>
    %cst_8 = arith.constant 0.000000e+00 : f32
    %8 = vector.broadcast %cst_8 : f32 to vector<16x32xf32>
    %9 = arith.maximumf %7, %8 : vector<16x32xf32>
    %c0_9 = arith.constant 0 : index
    %c0_10 = arith.constant 0 : index
    %10 = vector.load %arg4[%c0_9, %c0_10] : memref<32x128xf32, #tpu.memory_space<vmem>>, vector<32x128xf32>
    %cst_11 = arith.constant dense<0.000000e+00> : vector<16x128xf32>
    %11 = tpu.matmul %9, %10, %cst_11 {dimension_numbers = #tpu.dot_dimension_numbers<[1], [0], [0], [1], [0, 0, 1, 1], [], []>} : vector<16x32xf32>, vector<32x128xf32>, vector<16x128xf32> -> vector<16x128xf32>
    %c0_12 = arith.constant 0 : index
    %c0_13 = arith.constant 0 : index
    %12 = vector.load %arg1[%c0_12, %c0_13] : memref<16x16xf32, #tpu.memory_space<vmem>>, vector<16x16xf32>
    %cst_14 = arith.constant dense<0.000000e+00> : vector<16x128xf32>
    %13 = tpu.matmul %12, %11, %cst_14 {dimension_numbers = #tpu.dot_dimension_numbers<[1], [0], [0], [1], [0, 0, 1, 1], [], []>} : vector<16x16xf32>, vector<16x128xf32>, vector<16x128xf32> -> vector<16x128xf32>
    %c0_15 = arith.constant 0 : index
    %c0_16 = arith.constant 0 : index
    %14 = vector.load %arg5[%c0_15, %c0_16] : memref<1x128xf32, #tpu.memory_space<vmem>>, vector<1x128xf32>
    %15 = vector.broadcast %14 : vector<1x128xf32> to vector<16x128xf32>
    %16 = arith.addf %13, %15 : vector<16x128xf32>
    %cst_17 = arith.constant 0.000000e+00 : f32
    %17 = vector.broadcast %cst_17 : f32 to vector<16x128xf32>
    %18 = arith.maximumf %16, %17 : vector<16x128xf32>
    %cst_18 = arith.constant 1.000000e+00 : f32
    %19 = vector.broadcast %cst_18 : f32 to vector<1x16xf32>
    %cst_19 = arith.constant dense<0.000000e+00> : vector<1x128xf32>
    %20 = tpu.matmul %19, %18, %cst_19 {dimension_numbers = #tpu.dot_dimension_numbers<[1], [0], [0], [1], [0, 0, 1, 1], [], []>} : vector<1x16xf32>, vector<16x128xf32>, vector<1x128xf32> -> vector<1x128xf32>
    %cst_20 = arith.constant 6.250000e-02 : f32
    %21 = vector.broadcast %cst_20 : f32 to vector<1x128xf32>
    %22 = arith.mulf %20, %21 : vector<1x128xf32>
    %cst_21 = arith.constant 0.000000e+00 : f32
    %23 = vector.broadcast %cst_21 : f32 to vector<1x128xf32>
    %24 = arith.maximumf %22, %23 : vector<1x128xf32>
    %25 = tpu.iota {dimensions = array<i32: 1>} : vector<1x128xi32>
    %c8_i32 = arith.constant 8 : i32
    %26 = vector.broadcast %c8_i32 : i32 to vector<1x128xi32>
    %27 = arith.cmpi slt, %25, %26 : vector<1x128xi32>
    %cst_22 = arith.constant 0xFF800000 : f32
    %28 = vector.broadcast %cst_22 : f32 to vector<1x128xf32>
    %29 = arith.select %27, %24, %28 : vector<1x128xi1>, vector<1x128xf32>
    %cst_23 = arith.constant dense<0xFF800000> : vector<1xf32>
    %30 = vector.multi_reduction <maximumf>, %29, %cst_23 [1] : vector<1x128xf32> to vector<1xf32>
    %31 = vector.shape_cast %30 : vector<1xf32> to vector<1x1xf32>
    %32 = vector.broadcast %31 : vector<1x1xf32> to vector<1x128xf32>
    %33 = arith.subf %24, %32 : vector<1x128xf32>
    %34 = math.exp %33 : vector<1x128xf32>
    %cst_24 = arith.constant 0.000000e+00 : f32
    %35 = vector.broadcast %cst_24 : f32 to vector<1x128xf32>
    %36 = arith.select %27, %34, %35 : vector<1x128xi1>, vector<1x128xf32>
    %cst_25 = arith.constant dense<0.000000e+00> : vector<1xf32>
    %37 = vector.multi_reduction <add>, %36, %cst_25 [1] : vector<1x128xf32> to vector<1xf32>
    %38 = vector.shape_cast %37 : vector<1xf32> to vector<1x1xf32>
    %39 = math.log %38 : vector<1x1xf32>
    %40 = vector.broadcast %31 : vector<1x1xf32> to vector<1x128xf32>
    %41 = arith.subf %24, %40 : vector<1x128xf32>
    %42 = vector.broadcast %39 : vector<1x1xf32> to vector<1x128xf32>
    %43 = arith.subf %41, %42 : vector<1x128xf32>
    %c0_26 = arith.constant 0 : index
    %c0_27 = arith.constant 0 : index
    %44 = vector.load %arg6[%c0_26, %c0_27] : memref<1x128xf32, #tpu.memory_space<vmem>>, vector<1x128xf32>
    tpu.vector_store %arg6[%c0_26, %c0_27], %43 {strides = array<i32>} : memref<1x128xf32, #tpu.memory_space<vmem>>, vector<1x128xf32>,
    return
  }
}

</mosaic_0001>

<llo_original>
// kernel: tpu_custom_call.1
$region0: #{tpu_custom_call.1}
  #allocation0 [shape = 'u32[]', space=smem, size = 0x4, offset = 0x4, fixed_abs, tag = 'smem constant byte address 0x4 - core index']
  #allocation1 [shape = 'u32[72,128]{1,0:T(1,128)}', space=vmem, size = 0x9000, scoped, tag = 'internal scratch']
  %s0 = inlined_call_operand.hbm [shape: f32[16,32], index: 0, kind: input, shape index: {}]
  %s1 = inlined_call_operand.hbm [shape: f32[16,16], index: 1, kind: input, shape index: {}]
  %s2 = inlined_call_operand.hbm [shape: f32[32,32], index: 2, kind: input, shape index: {}]
  %s3 = inlined_call_operand.vmem [shape: f32[1,32], index: 3, kind: input, shape index: {}]
  %s4 = inlined_call_operand.hbm [shape: f32[32,128], index: 4, kind: input, shape index: {}]
  %s5 = inlined_call_operand.vmem [shape: f32[1,128], index: 5, kind: input, shape index: {}]
  %s6 = inlined_call_operand.hbm [shape: f32[1,128], index: 6, kind: output, shape index: {}]
  %s7 = sld [smem:[#allocation0]]
  $region50: #{tpu_custom_call.1} parent=0
    _
  %s9 = ssub.s32 1, %s7
  %s10 = scalar_select 0, %s9, %s7
  $region1: #{tpu_custom_call.1} parent=0
    #allocation2 [shape = 'u8[8192]{0}', space=vmem, size = 0x2000, scoped, tag = 'input window, operand 0, single buffered']
    #allocation3 [shape = 's32[1]{0}', space=sflag, size = 0x4, scoped, tag = 'scoped memory for tpu_custom_call.1']
    #allocation4 [shape = 's32[1]{0}', space=sflag, size = 0x4, scoped, tag = 'scoped memory for tpu_custom_call.1']
    #allocation5 [shape = 'u8[8192]{0}', space=vmem, size = 0x2000, scoped, tag = 'input window, operand 1, single buffered']
    #allocation6 [shape = 's32[1]{0}', space=sflag, size = 0x4, scoped, tag = 'scoped memory for tpu_custom_call.1']
    #allocation7 [shape = 'u8[16384]{0}', space=vmem, size = 0x4000, scoped, tag = 'input window, operand 2, single buffered']
    #allocation8 [shape = 'u8[16384]{0}', space=vmem, size = 0x4000, scoped, tag = 'input window, operand 4, single buffered']
    #allocation9 [shape = 's32[1]{0}', space=sflag, size = 0x4, scoped, tag = 'scoped memory for tpu_custom_call.1']
    #allocation10 [shape = 'u8[512]{0}', space=vmem, size = 0x400, scoped, tag = 'output window, operand 0, single buffered']
    %11 = vsyncpa [#allocation3], 0
    %12 = vsyncpa [#allocation6], 0
    %13 = vsyncpa [#allocation9], 0
    %14 = vsyncpa [#allocation4], 0
    // Predicated region
    $region2: #{tpu_custom_call.1} parent=1 // pred_check
      _
    $region3: #{tpu_custom_call.1} parent=1 // pred_check_branch
      %16 = sbr.rel (0) target = $region5
    $region4: #{tpu_custom_call.1} parent=1 // pred_region
      %18 = vsyncadd [#allocation3], 0
      %s19 = sshll.u32 %s0, 4
      %s20 = int_to_ptr.hbm [resolvable:$true] %s19
      %s21 = sshll.u32 [#allocation2], 4
      %s22 = int_to_ptr.vmem [resolvable:$true] %s21
      %27 = dma.hbm_to_vmem [thread:$0]  %s20, 256, %s22, [#allocation3], 128, 128, 8
    $region5: #{tpu_custom_call.1} parent=1 // pred_fallthru
      _
    // Predicated region
    $region6: #{tpu_custom_call.1} parent=1 // pred_check
      _
    $region7: #{tpu_custom_call.1} parent=1 // pred_check_branch
      %29 = sbr.rel (0) target = $region9
    $region8: #{tpu_custom_call.1} parent=1 // pred_region
      %31 = vsyncadd [#allocation6], 0
      %s32 = sshll.u32 %s1, 4
      %s33 = int_to_ptr.hbm [resolvable:$true] %s32
      %s34 = sshll.u32 [#allocation5], 4
      %s35 = int_to_ptr.vmem [resolvable:$true] %s34
      %40 = dma.hbm_to_vmem [thread:$0]  %s33, 256, %s35, [#allocation6], 128, 128, 8
    $region9: #{tpu_custom_call.1} parent=1 // pred_fallthru
      _
    // Predicated region
    $region10: #{tpu_custom_call.1} parent=1 // pred_check
      _
    $region11: #{tpu_custom_call.1} parent=1 // pred_check_branch
      %42 = sbr.rel (0) target = $region13
    $region12: #{tpu_custom_call.1} parent=1 // pred_region
      %44 = vsyncadd [#allocation6], 0
      %s45 = sshll.u32 %s2, 4
      %s46 = int_to_ptr.hbm [resolvable:$true] %s45
      %s47 = sshll.u32 [#allocation7], 4
      %s48 = int_to_ptr.vmem [resolvable:$true] %s47
      %53 = dma.hbm_to_vmem [thread:$0]  %s46, 512, %s48, [#allocation6], 128, 128, 8
    $region13: #{tpu_custom_call.1} parent=1 // pred_fallthru
      _
    // Predicated region
    $region14: #{tpu_custom_call.1} parent=1 // pred_check
      _
    $region15: #{tpu_custom_call.1} parent=1 // pred_check_branch
      %55 = sbr.rel (0) target = $region17
    $region16: #{tpu_custom_call.1} parent=1 // pred_region
      _
    $region17: #{tpu_custom_call.1} parent=1 // pred_fallthru
      _
    // Predicated region
    $region18: #{tpu_custom_call.1} parent=1 // pred_check
      _
    $region19: #{tpu_custom_call.1} parent=1 // pred_check_branch
      %57 = sbr.rel (0) target = $region21
    $region20: #{tpu_custom_call.1} parent=1 // pred_region
      %59 = vsyncadd [#allocation9], 0
      %s60 = sshll.u32 %s4, 4
      %s61 = int_to_ptr.hbm [resolvable:$true] %s60
      %s62 = sshll.u32 [#allocation8], 4
      %s63 = int_to_ptr.vmem [resolvable:$true] %s62
      %68 = dma.hbm_to_vmem [thread:$0]  %s61, 512, %s63, [#allocation9], 128, 128, 8
    $region21: #{tpu_custom_call.1} parent=1 // pred_fallthru
      _
    // Predicated region
    $region22: #{tpu_custom_call.1} parent=1 // pred_check
      _
    $region23: #{tpu_custom_call.1} parent=1 // pred_check_branch
      %70 = sbr.rel (0) target = $region25
    $region24: #{tpu_custom_call.1} parent=1 // pred_region
      _
    $region25: #{tpu_custom_call.1} parent=1 // pred_fallthru
      _
    // Predicated region
    $region26: #{tpu_custom_call.1} parent=1 // pred_check
      _
    $region27: #{tpu_custom_call.1} parent=1 // pred_check_branch
      %72 = sbr.rel (0) target = $region29
    $region28: #{tpu_custom_call.1} parent=1 // pred_region
      %74 = dma.done [#allocation3], 256
    $region29: #{tpu_custom_call.1} parent=1 // pred_fallthru
      _
    // Predicated region
    $region30: #{tpu_custom_call.1} parent=1 // pred_check
      _
    $region31: #{tpu_custom_call.1} parent=1 // pred_check_branch
      %76 = sbr.rel (0) target = $region33
    $region32: #{tpu_custom_call.1} parent=1 // pred_region
      %78 = dma.done [#allocation6], 256
    $region33: #{tpu_custom_call.1} parent=1 // pred_fallthru
      _
    // Predicated region
    $region34: #{tpu_custom_call.1} parent=1 // pred_check
      _
    $region35: #{tpu_custom_call.1} parent=1 // pred_check_branch
      %80 = sbr.rel (0) target = $region37
    $region36: #{tpu_custom_call.1} parent=1 // pred_region
      %82 = dma.done [#allocation6], 512
    $region37: #{tpu_custom_call.1} parent=1 // pred_fallthru
      _
    // Predicated region
    $region38: #{tpu_custom_call.1} parent=1 // pred_check
      _
    $region39: #{tpu_custom_call.1} parent=1 // pred_check_branch
      %84 = sbr.rel (0) target = $region41
    $region40: #{tpu_custom_call.1} parent=1 // pred_region
      %86 = dma.done [#allocation9], 512
    $region41: #{tpu_custom_call.1} parent=1 // pred_fallthru
      _
    %v87 = vld [vmem:[#allocation2] sm:$0xff]
    %v88 = vld [vmem:[#allocation2 + $0x8] sm:$0xff]
    %v89 = vld [vmem:[#allocation7] sm:$0xff]
    %v90 = vld [vmem:[#allocation7 + $0x8] sm:$0xff]
    %v91 = vld [vmem:[#allocation7 + $0x10] sm:$0xff]
    %v92 = vld [vmem:[#allocation7 + $0x18] sm:$0xff]
    %vm93 = vcmask 261120
    %v95 = vsel %vm93, %v87, 0
    %v98 = vsel %vm93, %v88, 0
    %100 = vmatpush.msra.mxu0 0.0
    %101 = vmatpush.msra.mxu0 0.0
    %102 = vmatpush.msra.mxu0 0.0
    %103 = vmatpush.msra.mxu0 0.0
    %104 = vmatpush.msra.mxu0 0.0
    %105 = vmatpush.msra.mxu0 0.0
    %106 = vmatpush.msra.mxu0 0.0
    %107 = vmatpush.msra.mxu0 0.0
    %108 = vmatpush.msra.mxu0 0.0
    %109 = vmatpush.msra.mxu0 0.0
    %110 = vmatpush.msra.mxu0 0.0
    %111 = vmatpush.msra.mxu0 0.0
    %112 = vmatpush.msra.mxu0 %v92
    %113 = vmatpush.msra.mxu0 %v91
    %114 = vmatpush.msra.mxu0 %v90
    %115 = vmatpush.msra.mxu0 %v89
    %116 = vmatmul.f32.gmra.mxu0 %v95
    %v117 = vpop.f32.mrf.mxu0
    %v118 = vadd.f32 0.0, %v117
    %119 = vmatmul.f32.gmra.mxu0 %v98
    %v120 = vpop.f32.mrf.mxu0
    %v121 = vadd.f32 0.0, %v120
    %122 = vdwg.mxu0
    %v123 = vld [vmem:[#allocation5] sm:$0xff]
    %v124 = vld [vmem:[#allocation5 + $0x8] sm:$0xff]
    %v125 = vld [vmem:[%s3] sm:$0x1]
    %v127 = vperm.slane %v125, 0
    %vm129 = vcmask 130048
    %v131 = vsel %vm129, %v123, 0
    %v134 = vsel %vm129, %v124, 0
    %136 = vmatpush.msra.mxu0 0.0
    %137 = vmatpush.msra.mxu0 0.0
    %138 = vmatpush.msra.mxu0 0.0
    %139 = vmatpush.msra.mxu0 0.0
    %140 = vmatpush.msra.mxu0 0.0
    %141 = vmatpush.msra.mxu0 0.0
    %142 = vmatpush.msra.mxu0 0.0
    %143 = vmatpush.msra.mxu0 0.0
    %144 = vmatpush.msra.mxu0 0.0
    %145 = vmatpush.msra.mxu0 0.0
    %146 = vmatpush.msra.mxu0 0.0
    %147 = vmatpush.msra.mxu0 0.0
    %148 = vmatpush.msra.mxu0 0.0
    %149 = vmatpush.msra.mxu0 0.0
    %150 = vmatpush.msra.mxu0 %v121
    %151 = vmatpush.msra.mxu0 %v118
    %152 = vmatmul.f32.gmra.mxu0 %v131
    %v153 = vpop.f32.mrf.mxu0
    %v154 = vadd.f32 %v127, %v153
    %155 = vmatmul.f32.gmra.mxu0 %v134
    %v156 = vpop.f32.mrf.mxu0
    %v157 = vadd.f32 %v127, %v156
    %158 = vdwg.mxu0
    %v159 = vmax.f32 %v154, 0.0
    %v160 = vmax.f32 %v157, 0.0
    %v161 = vld [vmem:[#allocation8] sm:$0xff]
    %v162 = vld [vmem:[#allocation8 + $0x8] sm:$0xff]
    %v163 = vld [vmem:[#allocation8 + $0x10] sm:$0xff]
    %v164 = vld [vmem:[#allocation8 + $0x18] sm:$0xff]
    %v166 = vsel %vm93, %v159, 0
    %v169 = vsel %vm93, %v160, 0
    %171 = vmatpush.msra.mxu0 0.0
    %172 = vmatpush.msra.mxu0 0.0
    %173 = vmatpush.msra.mxu0 0.0
    %174 = vmatpush.msra.mxu0 0.0
    %175 = vmatpush.msra.mxu0 0.0
    %176 = vmatpush.msra.mxu0 0.0
    %177 = vmatpush.msra.mxu0 0.0
    %178 = vmatpush.msra.mxu0 0.0
    %179 = vmatpush.msra.mxu0 0.0
    %180 = vmatpush.msra.mxu0 0.0
    %181 = vmatpush.msra.mxu0 0.0
    %182 = vmatpush.msra.mxu0 0.0
    %183 = vmatpush.msra.mxu0 %v164
    %184 = vmatpush.msra.mxu0 %v163
    %185 = vmatpush.msra.mxu0 %v162
    %186 = vmatpush.msra.mxu0 %v161
    %187 = vmatmul.f32.gmra.mxu0 %v166
    %v188 = vpop.f32.mrf.mxu0
    %v189 = vadd.f32 0.0, %v188
    %190 = vmatmul.f32.gmra.mxu0 %v169
    %v191 = vpop.f32.mrf.mxu0
    %v192 = vadd.f32 0.0, %v191
    %193 = vdwg.mxu0
    %v194 = vld [vmem:[%s5] sm:$0x1]
    %v196 = vperm.slane %v194, 0
    %198 = vmatpush.msra.mxu0 0.0
    %199 = vmatpush.msra.mxu0 0.0
    %200 = vmatpush.msra.mxu0 0.0
    %201 = vmatpush.msra.mxu0 0.0
    %202 = vmatpush.msra.mxu0 0.0
    %203 = vmatpush.msra.mxu0 0.0
    %204 = vmatpush.msra.mxu0 0.0
    %205 = vmatpush.msra.mxu0 0.0
    %206 = vmatpush.msra.mxu0 0.0
    %207 = vmatpush.msra.mxu0 0.0
    %208 = vmatpush.msra.mxu0 0.0
    %209 = vmatpush.msra.mxu0 0.0
    %210 = vmatpush.msra.mxu0 0.0
    %211 = vmatpush.msra.mxu0 0.0
    %212 = vmatpush.msra.mxu0 %v192
    %213 = vmatpush.msra.mxu0 %v189
    %214 = vmatmul.f32.gmra.mxu0 %v131
    %v215 = vpop.f32.mrf.mxu0
    %v216 = vadd.f32 %v196, %v215
    %217 = vmatmul.f32.gmra.mxu0 %v134
    %v218 = vpop.f32.mrf.mxu0
    %v219 = vadd.f32 %v196, %v218
    %220 = vdwg.mxu0
    %v221 = vmax.f32 %v216, 0.0
    %v222 = vmax.f32 %v219, 0.0
    %v224 = vsel %vm129, 1.0, 0
    %226 = vmatpush.msra.mxu0 0.0
    %227 = vmatpush.msra.mxu0 0.0
    %228 = vmatpush.msra.mxu0 0.0
    %229 = vmatpush.msra.mxu0 0.0
    %230 = vmatpush.msra.mxu0 0.0
    %231 = vmatpush.msra.mxu0 0.0
    %232 = vmatpush.msra.mxu0 0.0
    %233 = vmatpush.msra.mxu0 0.0
    %234 = vmatpush.msra.mxu0 0.0
    %235 = vmatpush.msra.mxu0 0.0
    %236 = vmatpush.msra.mxu0 0.0
    %237 = vmatpush.msra.mxu0 0.0
    %238 = vmatpush.msra.mxu0 0.0
    %239 = vmatpush.msra.mxu0 0.0
    %240 = vmatpush.msra.mxu0 %v222
    %241 = vmatpush.msra.mxu0 %v221
    %242 = vmatmul.f32.gmra.mxu0 %v224
    %v243 = vpop.f32.mrf.mxu0
    %v244 = vadd.f32 0.0, %v243
    %245 = vdwg.mxu0
    %v246 = vmul.f32 %v244, 0.0625
    %v247 = vmax.f32 %v246, 0.0
    %v248 = vlaneseq
    %v249 = vand.u32 %v248, 127
    %vm250 = vcmp.lt.s32.totalorder %v249, 8
    %v251 = vsel %vm250, %v247, -inf
    %vm252 = vcmask 1040384
    %v253 = vsel %vm252, %v251, -inf
    %254 = vmax.xlane.f32.xlu0 %v253
    %v255 = vpop.xlane.xlu0 %254
    %v256 = vsub.f32 %v247, %v255
    %v257 = vmul.f32 %v256, 1.442695
    %v258 = vpow.pop %v257
    %v259 = vsel %vm250, %v258, 0.0
    %v260 = vsel %vm252, %v259, 0.0
    %261 = vadd.xlane.f32.xlu0 %v260
    %v262 = vpop.xlane.xlu0 %261
    %v263 = vlog2.pop %v262
    %v264 = vmul.f32 %v263, 0.6931472
    %v265 = vsub.f32 %v256, %v264
    %266 = vst [vmem:[#allocation10] sm:$0x1] %v265
    // Predicated region
    $region42: #{tpu_custom_call.1} parent=1 // pred_check
      _
    $region43: #{tpu_custom_call.1} parent=1 // pred_check_branch
      %268 = sbr.rel (0) target = $region45
    $region44: #{tpu_custom_call.1} parent=1 // pred_region
      %270 = vsyncadd [#allocation4], 0
      %s272 = sshll.u32 [#allocation10], 4
      %s273 = int_to_ptr.vmem [resolvable:$true] %s272
      %s274 = sshll.u32 %s6, 4
      %s275 = int_to_ptr.hbm [resolvable:$true] %s274
      %277 = dma.vmem_to_hbm [thread:$0]  %s273, 16, %s275, [#allocation4]
    $region45: #{tpu_custom_call.1} parent=1 // pred_fallthru
      _
    // Predicated region
    $region46: #{tpu_custom_call.1} parent=1 // pred_check
      _
    $region47: #{tpu_custom_call.1} parent=1 // pred_check_branch
      %279 = sbr.rel (0) target = $region49
    $region48: #{tpu_custom_call.1} parent=1 // pred_region
      %281 = dma.done [#allocation4], 16
    $region49: #{tpu_custom_call.1} parent=1 // pred_fallthru
      _
    %282 = vsyncpa [#allocation3], 1
    %283 = vsyncpa [#allocation6], 1
    %284 = vsyncpa [#allocation9], 1
    %285 = vsyncpa [#allocation4], 1

</llo_original>
